<compile_context>
chip_gen: v5e
topology: v5e:2x2
jax: 0.10.0
libtpu: 0.0.40
codegen_flags: <defaults>
</compile_context>

<pallas_src>
import functools

import jax
import jax.numpy as jnp
import numpy as np
from jax import lax
from jax.experimental import pallas as pl
from jax.experimental.pallas import tpu as pltpu

KERNEL_SIZE = 5
STRIDE = 2
PADDING = 2
NEG_SLOPE = 0.2
LANE = 128


def _round_up(x, m):
    return (x + m - 1) // m * m


def _vmem_capacity_bytes():
    try:
        return int(pltpu.get_tpu_info().vmem_capacity_bytes)
    except Exception:
        return 64 * 1024 * 1024  # conservative fallback (v7x-sized VMEM)


def _pick_tn(coutp):
    """Output-tile width: 256 on the 256-wide MXU chips (v6e/v7x), else 128."""
    if coutp % 256 == 0:
        try:
            kind = jax.devices()[0].device_kind.lower()
        except Exception:
            kind = ""
        if any(t in kind for t in ("v6", "v7", "7x")):
            return 256
    return LANE


def _pick_row_tile(ho, wo_p, wp2_p, cp, tn, k_fused, in_itemsize):
    """Largest row-band height th whose per-step VMEM footprint fits the budget.

    th does NOT have to divide Ho (the tail band reads zero-padded rows which
    are sliced off after the kernel), so a large band can always be chosen.
    """
    cap = _vmem_capacity_bytes()
    budget = min(cap // 2, 40 * 1024 * 1024)
    for th in range(ho, 0, -1):
        hs = _round_up(ho, th) + 2
        m_rows = th * wo_p
        img_b = 2 * hs * wp2_p * cp * in_itemsize   # resident s2d image (2 bufs)
        lhs_b = m_rows * k_fused * in_itemsize      # im2col scratch
        w_b = 2 * k_fused * tn * in_itemsize        # weight slab (2 bufs)
        out_b = 2 * m_rows * tn * 4                 # output block (2 bufs)
        acc_b = 3 * m_rows * tn * 4                 # dot result + epilogue temps
        if img_b + lhs_b + w_b + out_b + acc_b + 2 * tn * 4 <= budget:
            return th
    return 1


def _conv_fused_kernel(x_ref, w_ref, b_ref, o_ref, lhs_ref, *, th, wo_p, cp,
                       apply_act):
    """One (batch, Cout-tile, row-band) output block.

    x_ref:   (Hs_p, Wp2_p, Cp)   full s2d image (VMEM-resident; re-fetched
                                 from HBM only when the batch index changes)
    w_ref:   (9*Cp, TN)          fused-K weight slab for this Cout tile
    b_ref:   (1, TN)             bias (f32)
    o_ref:   (th, Wo_p, TN)      output block (lane-dense)
    lhs_ref: (th*Wo_p, 9*Cp)     im2col scratch (input dtype)
    """
    tn = w_ref.shape[1]
    m_rows = th * wo_p
    r0 = pl.program_id(2) * th
    # Pack the 9 shifted taps into the fused-K im2col scratch.
    # (For very small Cp these are sub-128-lane stores; if the single vst slot
    #  on v5e ever saturates, fall back to 3-tap fusion per the review.)
    for dh in range(3):
        for dw in range(3):
            t = dh * 3 + dw
            tap = x_ref[pl.ds(r0 + dh, th), pl.ds(dw, wo_p), :]
            lhs_ref[:, t * cp:(t + 1) * cp] = tap.reshape(m_rows, cp)
    # Single MXU GEMM over K = 9*Cp, f32 accumulate.
    acc = jnp.dot(lhs_ref[...], w_ref[...], preferred_element_type=jnp.float32)
    acc = acc + b_ref[...]
    if apply_act:
        acc = jnp.maximum(acc, NEG_SLOPE * acc)          # LeakyReLU(0.2)
    o_ref[...] = acc.reshape(th, wo_p, tn).astype(o_ref.dtype)


@functools.partial(jax.jit, static_argnames=("activation", "use_bf16"))
def conv_block_forward(x_nchw, weight, bias, activation="leaky-relu",
                       use_bf16=False):
    """ConvBlock forward: Conv2d(k=5, s=2, p=2) [+ LeakyReLU(0.2)].

    x_nchw: (N, Cin, H, W)    float32
    weight: (Cout, Cin, 5, 5) float32 (PyTorch Conv2d layout)
    bias:   (Cout,)           float32
    returns (N, Cout, Ho, Wo) float32
    """
    n, cin, h, w = x_nchw.shape
    cout = weight.shape[0]
    ho = (h + 2 * PADDING - KERNEL_SIZE) // STRIDE + 1
    wo = (w + 2 * PADDING - KERNEL_SIZE) // STRIDE + 1

    in_dtype = jnp.bfloat16 if use_bf16 else jnp.float32
    in_itemsize = 2 if use_bf16 else 4
    sub = 16 if use_bf16 else 8            # packed-sublane quantum

    cp = _round_up(4 * cin, sub)           # s2d channel dim (contraction piece)
    cin_p = cp // 4
    coutp = _round_up(cout, LANE)          # lane-dense output columns
    tn = _pick_tn(coutp)
    wo_p = _round_up(wo, sub)              # tile-aligned in-kernel reshapes
    wp2_p = wo_p + 2
    k_fused = 9 * cp

    th = _pick_row_tile(ho, wo_p, wp2_p, cp, tn, k_fused, in_itemsize)
    ho_p = _round_up(ho, th)
    hs_p = ho_p + 2
    n_m = ho_p // th
    n_co = coutp // tn

    # ---- input: NCHW -> NHWC -> one pad -> space-to-depth (2x2 phases). ----
    x = jnp.transpose(x_nchw, (0, 2, 3, 1)).astype(in_dtype)        # NHWC
    pad_b = 2 * hs_p - h - PADDING
    pad_r = 2 * wp2_p - w - PADDING
    x_pad = jnp.pad(x, ((0, 0), (PADDING, pad_b), (PADDING, pad_r),
                        (0, cin_p - cin)))
    x_s2d = x_pad.reshape(n, hs_p, 2, wp2_p, 2, cin_p)
    x_s2d = jnp.transpose(x_s2d, (0, 1, 3, 2, 4, 5)).reshape(n, hs_p, wp2_p, cp)
    # TODO(synk): fold the s2d shuffle into the kernel's input DMA (strided
    #             copies from a pl.ANY ref) so the raw input is read once.

    # ---- weights: (Cout, Cin, 5, 5) -> fused-K (9*Cp, CoutP) slab. ----
    w6 = jnp.pad(weight.astype(jnp.float32),
                 ((0, 0), (0, cin_p - cin), (0, 1), (0, 1)))  # 5x5 -> 6x6 zeros
    w6 = w6.reshape(cout, cin_p, 3, 2, 3, 2)          # (co, ci, dh, ph, dw, pw)
    w2 = jnp.transpose(w6, (2, 4, 3, 5, 1, 0)).reshape(k_fused, cout)
    w2 = jnp.pad(w2, ((0, 0), (0, coutp - cout))).astype(in_dtype)
    b2 = jnp.pad(bias.astype(jnp.float32), (0, coutp - cout)).reshape(1, coutp)

    kernel = functools.partial(_conv_fused_kernel, th=th, wo_p=wo_p, cp=cp,
                               apply_act=(activation == "leaky-relu"))
    cap = _vmem_capacity_bytes()
    vmem_limit = int(min(cap * 3 // 4, 110 * 1024 * 1024))

    out4 = pl.pallas_call(
        kernel,
        out_shape=jax.ShapeDtypeStruct((n, ho_p, wo_p, coutp), jnp.float32),
        grid=(n, n_co, n_m),            # batch, Cout tiles, row bands (inner)
        in_specs=[
            # Full s2d image; block index depends only on the batch coordinate
            # -> one HBM fetch per image, resident across Cout/row steps.
            pl.BlockSpec((None, hs_p, wp2_p, cp), lambda b, j, i: (b, 0, 0, 0)),
            pl.BlockSpec((k_fused, tn), lambda b, j, i: (0, j)),
            pl.BlockSpec((1, tn), lambda b, j, i: (0, j)),
        ],
        out_specs=pl.BlockSpec((None, th, wo_p, tn), lambda b, j, i: (b, i, 0, j)),
        scratch_shapes=[pltpu.VMEM((th * wo_p, k_fused), in_dtype)],
        compiler_params=pltpu.CompilerParams(
            dimension_semantics=("parallel", "parallel", "parallel"),
            vmem_limit_bytes=vmem_limit),
    )(x_s2d, w2, b2)

    # (N, Ho_p, Wo_p, CoutP) -> (N, Ho, Wo, Cout) -> NCHW at the boundary.
    out = out4[:, :ho, :wo, :cout]
    return jnp.transpose(out, (0, 3, 1, 2))


def _reference(x_nchw, weight, bias):
    """Pure-JAX reference (lax conv) mirroring PyTorch Conv2d + LeakyReLU."""
    out = lax.conv_general_dilated(
        x_nchw, weight,
        window_strides=(STRIDE, STRIDE),
        padding=((PADDING, PADDING), (PADDING, PADDING)),
        dimension_numbers=("NCHW", "OIHW", "NCHW"))
    out = out + bias.reshape(1, -1, 1, 1)
    return jnp.where(out >= 0, out, NEG_SLOPE * out)


if __name__ == "__main__":
    # Small, deterministic setup: N=2, Cin=4, H=W=16, Cout=8.
    N, C_IN, H, W = 2, 4, 16, 16
    C_OUT = 8

    key = jax.random.PRNGKey(0)
    kx, kw, kb = jax.random.split(key, 3)

    x = jax.random.normal(kx, (N, C_IN, H, W), dtype=jnp.float32)
    fan_in = C_IN * KERNEL_SIZE * KERNEL_SIZE
    bound = 1.0 / np.sqrt(fan_in)
    weight = jax.random.uniform(
        kw, (C_OUT, C_IN, KERNEL_SIZE, KERNEL_SIZE),
        minval=-bound, maxval=bound, dtype=jnp.float32)
    bias = jax.random.uniform(
        kb, (C_OUT,), minval=-bound, maxval=bound, dtype=jnp.float32)

    ref = jax.block_until_ready(_reference(x, weight, bias))

    # f32 path (tight check against the lax.conv reference).
    out = jax.block_until_ready(
        conv_block_forward(x, weight, bias, activation="leaky-relu"))
    np.testing.assert_allclose(np.asarray(out), np.asarray(ref),
                               rtol=1e-4, atol=1e-4)

    # bf16 LHS/weights path (MXU-native on all generations); f32 accumulate.
    out_bf16 = jax.block_until_ready(
        conv_block_forward(x, weight, bias, activation="leaky-relu",
                           use_bf16=True))
    np.testing.assert_allclose(np.asarray(out_bf16), np.asarray(ref),
                               rtol=5e-2, atol=5e-2)

    print("KERNEL_OK")
</pallas_src>

<mosaic_0001>
module attributes {stable_mosaic.version = 11 : i64} {
  func.func @_conv_fused_kernel(%arg0: i32, %arg1: i32, %arg2: i32, %arg3: memref<1x10x10x16xf32, #tpu.memory_space<vmem>>, %arg4: memref<144x128xf32, #tpu.memory_space<vmem>>, %arg5: memref<1x128xf32, #tpu.memory_space<vmem>>, %arg6: memref<1x8x8x128xf32, #tpu.memory_space<vmem>>, %arg7: memref<64x144xf32, #tpu.memory_space<vmem>>) attributes {dimension_semantics = [#tpu.dimension_semantics<parallel>, #tpu.dimension_semantics<parallel>, #tpu.dimension_semantics<parallel>], iteration_bounds = array<i64: 2, 1, 1>, scalar_prefetch = 0 : i64, scratch_operands = 1 : i64, tpu.core_type = #tpu.core_type<tc>, window_params = [{transform_indices = @transform_0, window_bounds = array<i64: 1, 10, 10, 16>}, {transform_indices = @transform_1, window_bounds = array<i64: 144, 128>}, {transform_indices = @transform_2, window_bounds = array<i64: 1, 128>}, {transform_indices = @transform_3, window_bounds = array<i64: 1, 8, 8, 128>}]} {
    %c8_i32 = arith.constant 8 : i32
    %0 = arith.muli %arg2, %c8_i32 : i32
    %c0_i32 = arith.constant 0 : i32
    %1 = arith.addi %0, %c0_i32 : i32
    %c0 = arith.constant 0 : index
    %2 = arith.index_cast %1 : i32 to index
    %c0_0 = arith.constant 0 : index
    %c0_1 = arith.constant 0 : index
    %3 = vector.load %arg3[%c0, %2, %c0_0, %c0_1] : memref<1x10x10x16xf32, #tpu.memory_space<vmem>>, vector<1x8x8x16xf32>
    %4 = vector.shape_cast %3 : vector<1x8x8x16xf32> to vector<8x8x16xf32>
    %5 = vector.shape_cast %4 : vector<8x8x16xf32> to vector<64x16xf32>
    %c0_2 = arith.constant 0 : index
    %c0_3 = arith.constant 0 : index
    %6 = vector.load %arg7[%c0_2, %c0_3] : memref<64x144xf32, #tpu.memory_space<vmem>>, vector<64x16xf32>
    tpu.vector_store %arg7[%c0_2, %c0_3], %5 {strides = array<i32>} : memref<64x144xf32, #tpu.memory_space<vmem>>, vector<64x16xf32>,
    %c0_i32_4 = arith.constant 0 : i32
    %7 = arith.addi %0, %c0_i32_4 : i32
    %c0_5 = arith.constant 0 : index
    %8 = arith.index_cast %7 : i32 to index
    %c1 = arith.constant 1 : index
    %c0_6 = arith.constant 0 : index
    %9 = vector.load %arg3[%c0_5, %8, %c1, %c0_6] : memref<1x10x10x16xf32, #tpu.memory_space<vmem>>, vector<1x8x8x16xf32>
    %10 = vector.shape_cast %9 : vector<1x8x8x16xf32> to vector<8x8x16xf32>
    %11 = vector.shape_cast %10 : vector<8x8x16xf32> to vector<64x16xf32>
    %c0_7 = arith.constant 0 : index
    %c16 = arith.constant 16 : index
    %12 = vector.load %arg7[%c0_7, %c16] : memref<64x144xf32, #tpu.memory_space<vmem>>, vector<64x16xf32>
    tpu.vector_store %arg7[%c0_7, %c16], %11 {strides = array<i32>} : memref<64x144xf32, #tpu.memory_space<vmem>>, vector<64x16xf32>,
    %c0_i32_8 = arith.constant 0 : i32
    %13 = arith.addi %0, %c0_i32_8 : i32
    %c0_9 = arith.constant 0 : index
    %14 = arith.index_cast %13 : i32 to index
    %c2 = arith.constant 2 : index
    %c0_10 = arith.constant 0 : index
    %15 = vector.load %arg3[%c0_9, %14, %c2, %c0_10] : memref<1x10x10x16xf32, #tpu.memory_space<vmem>>, vector<1x8x8x16xf32>
    %16 = vector.shape_cast %15 : vector<1x8x8x16xf32> to vector<8x8x16xf32>
    %17 = vector.shape_cast %16 : vector<8x8x16xf32> to vector<64x16xf32>
    %c0_11 = arith.constant 0 : index
    %c32 = arith.constant 32 : index
    %18 = vector.load %arg7[%c0_11, %c32] : memref<64x144xf32, #tpu.memory_space<vmem>>, vector<64x16xf32>
    tpu.vector_store %arg7[%c0_11, %c32], %17 {strides = array<i32>} : memref<64x144xf32, #tpu.memory_space<vmem>>, vector<64x16xf32>,
    %c1_i32 = arith.constant 1 : i32
    %19 = arith.addi %0, %c1_i32 : i32
    %c0_12 = arith.constant 0 : index
    %20 = arith.index_cast %19 : i32 to index
    %c0_13 = arith.constant 0 : index
    %c0_14 = arith.constant 0 : index
    %21 = vector.load %arg3[%c0_12, %20, %c0_13, %c0_14] : memref<1x10x10x16xf32, #tpu.memory_space<vmem>>, vector<1x8x8x16xf32>
    %22 = vector.shape_cast %21 : vector<1x8x8x16xf32> to vector<8x8x16xf32>
    %23 = vector.shape_cast %22 : vector<8x8x16xf32> to vector<64x16xf32>
    %c0_15 = arith.constant 0 : index
    %c48 = arith.constant 48 : index
    %24 = vector.load %arg7[%c0_15, %c48] : memref<64x144xf32, #tpu.memory_space<vmem>>, vector<64x16xf32>
    tpu.vector_store %arg7[%c0_15, %c48], %23 {strides = array<i32>} : memref<64x144xf32, #tpu.memory_space<vmem>>, vector<64x16xf32>,
    %c1_i32_16 = arith.constant 1 : i32
    %25 = arith.addi %0, %c1_i32_16 : i32
    %c0_17 = arith.constant 0 : index
    %26 = arith.index_cast %25 : i32 to index
    %c1_18 = arith.constant 1 : index
    %c0_19 = arith.constant 0 : index
    %27 = vector.load %arg3[%c0_17, %26, %c1_18, %c0_19] : memref<1x10x10x16xf32, #tpu.memory_space<vmem>>, vector<1x8x8x16xf32>
    %28 = vector.shape_cast %27 : vector<1x8x8x16xf32> to vector<8x8x16xf32>
    %29 = vector.shape_cast %28 : vector<8x8x16xf32> to vector<64x16xf32>
    %c0_20 = arith.constant 0 : index
    %c64 = arith.constant 64 : index
    %30 = vector.load %arg7[%c0_20, %c64] : memref<64x144xf32, #tpu.memory_space<vmem>>, vector<64x16xf32>
    tpu.vector_store %arg7[%c0_20, %c64], %29 {strides = array<i32>} : memref<64x144xf32, #tpu.memory_space<vmem>>, vector<64x16xf32>,
    %c1_i32_21 = arith.constant 1 : i32
    %31 = arith.addi %0, %c1_i32_21 : i32
    %c0_22 = arith.constant 0 : index
    %32 = arith.index_cast %31 : i32 to index
    %c2_23 = arith.constant 2 : index
    %c0_24 = arith.constant 0 : index
    %33 = vector.load %arg3[%c0_22, %32, %c2_23, %c0_24] : memref<1x10x10x16xf32, #tpu.memory_space<vmem>>, vector<1x8x8x16xf32>
    %34 = vector.shape_cast %33 : vector<1x8x8x16xf32> to vector<8x8x16xf32>
    %35 = vector.shape_cast %34 : vector<8x8x16xf32> to vector<64x16xf32>
    %c0_25 = arith.constant 0 : index
    %c80 = arith.constant 80 : index
    %36 = vector.load %arg7[%c0_25, %c80] : memref<64x144xf32, #tpu.memory_space<vmem>>, vector<64x16xf32>
    tpu.vector_store %arg7[%c0_25, %c80], %35 {strides = array<i32>} : memref<64x144xf32, #tpu.memory_space<vmem>>, vector<64x16xf32>,
    %c2_i32 = arith.constant 2 : i32
    %37 = arith.addi %0, %c2_i32 : i32
    %c0_26 = arith.constant 0 : index
    %38 = arith.index_cast %37 : i32 to index
    %c0_27 = arith.constant 0 : index
    %c0_28 = arith.constant 0 : index
    %39 = vector.load %arg3[%c0_26, %38, %c0_27, %c0_28] : memref<1x10x10x16xf32, #tpu.memory_space<vmem>>, vector<1x8x8x16xf32>
    %40 = vector.shape_cast %39 : vector<1x8x8x16xf32> to vector<8x8x16xf32>
    %41 = vector.shape_cast %40 : vector<8x8x16xf32> to vector<64x16xf32>
    %c0_29 = arith.constant 0 : index
    %c96 = arith.constant 96 : index
    %42 = vector.load %arg7[%c0_29, %c96] : memref<64x144xf32, #tpu.memory_space<vmem>>, vector<64x16xf32>
    tpu.vector_store %arg7[%c0_29, %c96], %41 {strides = array<i32>} : memref<64x144xf32, #tpu.memory_space<vmem>>, vector<64x16xf32>,
    %c2_i32_30 = arith.constant 2 : i32
    %43 = arith.addi %0, %c2_i32_30 : i32
    %c0_31 = arith.constant 0 : index
    %44 = arith.index_cast %43 : i32 to index
    %c1_32 = arith.constant 1 : index
    %c0_33 = arith.constant 0 : index
    %45 = vector.load %arg3[%c0_31, %44, %c1_32, %c0_33] : memref<1x10x10x16xf32, #tpu.memory_space<vmem>>, vector<1x8x8x16xf32>
    %46 = vector.shape_cast %45 : vector<1x8x8x16xf32> to vector<8x8x16xf32>
    %47 = vector.shape_cast %46 : vector<8x8x16xf32> to vector<64x16xf32>
    %c0_34 = arith.constant 0 : index
    %c112 = arith.constant 112 : index
    %48 = vector.load %arg7[%c0_34, %c112] : memref<64x144xf32, #tpu.memory_space<vmem>>, vector<64x16xf32>
    tpu.vector_store %arg7[%c0_34, %c112], %47 {strides = array<i32>} : memref<64x144xf32, #tpu.memory_space<vmem>>, vector<64x16xf32>,
    %c2_i32_35 = arith.constant 2 : i32
    %49 = arith.addi %0, %c2_i32_35 : i32
    %c0_36 = arith.constant 0 : index
    %50 = arith.index_cast %49 : i32 to index
    %c2_37 = arith.constant 2 : index
    %c0_38 = arith.constant 0 : index
    %51 = vector.load %arg3[%c0_36, %50, %c2_37, %c0_38] : memref<1x10x10x16xf32, #tpu.memory_space<vmem>>, vector<1x8x8x16xf32>
    %52 = vector.shape_cast %51 : vector<1x8x8x16xf32> to vector<8x8x16xf32>
    %53 = vector.shape_cast %52 : vector<8x8x16xf32> to vector<64x16xf32>
    %c0_39 = arith.constant 0 : index
    %c128 = arith.constant 128 : index
    %54 = vector.load %arg7[%c0_39, %c128] : memref<64x144xf32, #tpu.memory_space<vmem>>, vector<64x16xf32>
    tpu.vector_store %arg7[%c0_39, %c128], %53 {strides = array<i32>} : memref<64x144xf32, #tpu.memory_space<vmem>>, vector<64x16xf32>,
    %c0_40 = arith.constant 0 : index
    %c0_41 = arith.constant 0 : index
    %55 = vector.load %arg7[%c0_40, %c0_41] : memref<64x144xf32, #tpu.memory_space<vmem>>, vector<64x144xf32>
    %c0_42 = arith.constant 0 : index
    %c0_43 = arith.constant 0 : index
    %56 = vector.load %arg4[%c0_42, %c0_43] : memref<144x128xf32, #tpu.memory_space<vmem>>, vector<144x128xf32>
    %cst = arith.constant dense<0.000000e+00> : vector<64x128xf32>
    %57 = tpu.matmul %55, %56, %cst {dimension_numbers = #tpu.dot_dimension_numbers<[1], [0], [0], [1], [0, 0, 1, 1], [], []>} : vector<64x144xf32>, vector<144x128xf32>, vector<64x128xf32> -> vector<64x128xf32>
    %c0_44 = arith.constant 0 : index
    %c0_45 = arith.constant 0 : index
    %58 = vector.load %arg5[%c0_44, %c0_45] : memref<1x128xf32, #tpu.memory_space<vmem>>, vector<1x128xf32>
    %59 = vector.broadcast %58 : vector<1x128xf32> to vector<64x128xf32>
    %60 = arith.addf %57, %59 : vector<64x128xf32>
    %cst_46 = arith.constant 2.000000e-01 : f32
    %61 = vector.broadcast %cst_46 : f32 to vector<64x128xf32>
    %62 = arith.mulf %61, %60 : vector<64x128xf32>
    %63 = arith.maximumf %60, %62 : vector<64x128xf32>
    %64 = vector.shape_cast %63 : vector<64x128xf32> to vector<8x8x128xf32>
    %c0_47 = arith.constant 0 : index
    %c0_48 = arith.constant 0 : index
    %c0_49 = arith.constant 0 : index
    %c0_50 = arith.constant 0 : index
    %65 = vector.load %arg6[%c0_47, %c0_48, %c0_49, %c0_50] : memref<1x8x8x128xf32, #tpu.memory_space<vmem>>, vector<1x8x8x128xf32>
    %66 = vector.shape_cast %65 : vector<1x8x8x128xf32> to vector<8x8x128xf32>
    %67 = vector.shape_cast %64 : vector<8x8x128xf32> to vector<1x8x8x128xf32>
    tpu.vector_store %arg6[%c0_47, %c0_48, %c0_49, %c0_50], %67 {strides = array<i32>} : memref<1x8x8x128xf32, #tpu.memory_space<vmem>>, vector<1x8x8x128xf32>,
    return
  }
  func.func @transform_0(%arg0: i32, %arg1: i32, %arg2: i32) -> (i32, i32, i32, i32) {
    %c0_i32 = arith.constant 0 : i32
    %c0_i32_0 = arith.constant 0 : i32
    %c0_i32_1 = arith.constant 0 : i32
    %c0_i32_2 = arith.constant 0 : i32
    return %arg0, %c0_i32, %c0_i32_0, %c0_i32_1 : i32, i32, i32, i32
  }
  func.func @transform_1(%arg0: i32, %arg1: i32, %arg2: i32) -> (i32, i32) {
    %c0_i32 = arith.constant 0 : i32
    %c0_i32_0 = arith.constant 0 : i32
    return %c0_i32, %arg1 : i32, i32
  }
  func.func @transform_2(%arg0: i32, %arg1: i32, %arg2: i32) -> (i32, i32) {
    %c0_i32 = arith.constant 0 : i32
    %c0_i32_0 = arith.constant 0 : i32
    return %c0_i32, %arg1 : i32, i32
  }
  func.func @transform_3(%arg0: i32, %arg1: i32, %arg2: i32) -> (i32, i32, i32, i32) {
    %c0_i32 = arith.constant 0 : i32
    %c0_i32_0 = arith.constant 0 : i32
    return %arg0, %arg2, %c0_i32, %arg1 : i32, i32, i32, i32
  }
}

</mosaic_0001>

<llo_original>
// kernel: conv_block_forward.1
$region0: #{conv_block_forward.1}
  #allocation0 [shape = 'u32[]', space=smem, size = 0x4, offset = 0x4, fixed_abs, tag = 'smem constant byte address 0x4 - core index']
  #allocation1 [shape = 'u32[72,128]{1,0:T(1,128)}', space=vmem, size = 0x9000, scoped, tag = 'internal scratch']
  #allocation2 [shape = 'f32[64,144]{1,0:T(8,128)}', space=vmem, size = 0x10000, scoped, tag = 'scratch operand']
  %s0 = inlined_call_operand.vmem [shape: f32[2,10,10,16], index: 0, kind: input, shape index: {}]
  %s1 = inlined_call_operand.vmem [shape: f32[144,128], index: 1, kind: input, shape index: {}]
  %s2 = inlined_call_operand.vmem [shape: f32[1,128], index: 2, kind: input, shape index: {}]
  %s3 = inlined_call_operand.vmem [shape: f32[2,8,8,128], index: 3, kind: output, shape index: {}]
  %s4 = sld [smem:[#allocation0]]
  $region45: #{conv_block_forward.1} parent=0
    _
  %s6 = ssub.s32 1, %s4
  %s7 = scalar_select 0, %s6, %s4
  loop: start=0, step=1, limit=4
  $region2: #{conv_block_forward.1} parent=0 // loop_pre_header
    _
  $region3: #{conv_block_forward.1} parent=0 // loop_header
    %s9 = sphi 0, %s13
    %p10 = scmp.ge.s32.totalorder %s9, 4
    %s16 = sphi 0, %s35
    %s17 = sphi 0, %s31
    %s18 = sphi 0, %s27
    %s19 = sphi 0, %s16
    %s20 = sphi 0, %s17
    %s21 = sphi 0, %s18
    %s22 = sphi 0, %s19
    %s23 = sphi 0, %s20
    %s24 = sphi 0, %s21
    %s38 = sphi 0, %s40
    %s41 = sphi 0, %s38
    %s42 = sphi 0, %s41
    %s58 = sphi 0, %s42
    %s64 = sphi 0, %s66
    %s67 = sphi 0, %s64
    %s68 = sphi 0, %s67
    %s84 = sphi 0, %s68
    %s90 = sphi 0, %s92
    %s93 = sphi 0, %s90
    %s94 = sphi 0, %s93
    %s110 = sphi 0, %s94
    %s120 = sphi 0, %s122
    %s123 = sphi 0, %s120
    %s124 = sphi 0, %s123
    %s140 = sphi 0, %s124
  $region4: #{conv_block_forward.1} parent=0 // loop_header_branch
    %12 = sbr.rel (%p10) target = $region8
  $region5: #{conv_block_forward.1} parent=0 // loop_body
    %s14 = ssub.s32 %s9, 1
    %s15 = ssub.s32 %s9, 2
    %s25 = sadd.s32 1, %s18
    %p26 = scmp.ge.s32.totalorder %s25, 1
    %s27 = scalar_select %p26, 0, %s25
    %s28 = sadd.s32 1, %s17
    %s29 = scalar_select %p26, %s28, %s17
    %p30 = scmp.ge.s32.totalorder %s29, 1
    %s31 = scalar_select %p30, 0, %s29
    %s32 = sadd.s32 1, %s16
    %s33 = scalar_select %p30, %s32, %s16
    %p34 = scmp.ge.s32.totalorder %s33, 2
    %s35 = scalar_select %p34, 0, %s33
    %s36 = ssub.s32 %s16, %s35
    %p37 = scmp.eq.s32.totalorder %s36, 0
    %s39 = sadd.s32 %s38, 1
    %s40 = scalar_select %p37, %s38, %s39
    %p43 = pneg %p37
    %p44 = scmp.eq.s32.totalorder %s9, 1
    %p45 = por %p43, %p44
    %p46 = scmp.ne.s32.totalorder %s38, %s41
    %p47 = scmp.eq.s32.totalorder %s9, 0
    %p48 = por %p46, %p47
    %p49 = scmp.ne.s32.totalorder %s38, %s41
    %p50 = scmp.eq.s32.totalorder %s14, 1
    %p51 = por %p49, %p50
    %p52 = scmp.ne.s32.totalorder %s41, %s42
    %p53 = scmp.eq.s32.totalorder %s14, 0
    %p54 = por %p52, %p53
    %p55 = scmp.ne.s32.totalorder %s41, %s42
    %p56 = scmp.eq.s32.totalorder %s15, 1
    %p57 = por %p55, %p56
    %p59 = scmp.ne.s32.totalorder %s42, %s58
    %p60 = scmp.eq.s32.totalorder %s15, 0
    %p61 = por %p59, %p60
    %s62 = ssub.s32 %s17, %s31
    %p63 = scmp.eq.s32.totalorder %s62, 0
    %s65 = sadd.s32 %s64, 1
    %s66 = scalar_select %p63, %s64, %s65
    %p69 = pneg %p63
    %p70 = scmp.eq.s32.totalorder %s9, 1
    %p71 = por %p69, %p70
    %p72 = scmp.ne.s32.totalorder %s64, %s67
    %p73 = scmp.eq.s32.totalorder %s9, 0
    %p74 = por %p72, %p73
    %p75 = scmp.ne.s32.totalorder %s64, %s67
    %p76 = scmp.eq.s32.totalorder %s14, 1
    %p77 = por %p75, %p76
    %p78 = scmp.ne.s32.totalorder %s67, %s68
    %p79 = scmp.eq.s32.totalorder %s14, 0
    %p80 = por %p78, %p79
    %p81 = scmp.ne.s32.totalorder %s67, %s68
    %p82 = scmp.eq.s32.totalorder %s15, 1
    %p83 = por %p81, %p82
    %p85 = scmp.ne.s32.totalorder %s68, %s84
    %p86 = scmp.eq.s32.totalorder %s15, 0
    %p87 = por %p85, %p86
    %s88 = ssub.s32 %s17, %s31
    %p89 = scmp.eq.s32.totalorder %s88, 0
    %s91 = sadd.s32 %s90, 1
    %s92 = scalar_select %p89, %s90, %s91
    %p95 = pneg %p89
    %p96 = scmp.eq.s32.totalorder %s9, 1
    %p97 = por %p95, %p96
    %p98 = scmp.ne.s32.totalorder %s90, %s93
    %p99 = scmp.eq.s32.totalorder %s9, 0
    %p100 = por %p98, %p99
    %p101 = scmp.ne.s32.totalorder %s90, %s93
    %p102 = scmp.eq.s32.totalorder %s14, 1
    %p103 = por %p101, %p102
    %p104 = scmp.ne.s32.totalorder %s93, %s94
    %p105 = scmp.eq.s32.totalorder %s14, 0
    %p106 = por %p104, %p105
    %p107 = scmp.ne.s32.totalorder %s93, %s94
    %p108 = scmp.eq.s32.totalorder %s15, 1
    %p109 = por %p107, %p108
    %p111 = scmp.ne.s32.totalorder %s94, %s110
    %p112 = scmp.eq.s32.totalorder %s15, 0
    %p113 = por %p111, %p112
    %s114 = ssub.s32 %s16, %s35
    %s115 = ssub.s32 %s18, %s27
    %s116 = sor.u32 %s114, %s115
    %s117 = ssub.s32 %s17, %s31
    %s118 = sor.u32 %s116, %s117
    %p119 = scmp.eq.s32.totalorder %s118, 0
    %s121 = sadd.s32 %s120, 1
    %s122 = scalar_select %p119, %s120, %s121
    %p125 = pneg %p119
    %p126 = scmp.eq.s32.totalorder %s9, 1
    %p127 = por %p125, %p126
    %p128 = scmp.ne.s32.totalorder %s120, %s123
    %p129 = scmp.eq.s32.totalorder %s9, 0
    %p130 = por %p128, %p129
    %p131 = scmp.ne.s32.totalorder %s120, %s123
    %p132 = scmp.eq.s32.totalorder %s14, 1
    %p133 = por %p131, %p132
    %p134 = scmp.ne.s32.totalorder %s123, %s124
    %p135 = scmp.eq.s32.totalorder %s14, 0
    %p136 = por %p134, %p135
    %p137 = scmp.ne.s32.totalorder %s123, %s124
    %p138 = scmp.eq.s32.totalorder %s15, 1
    %p139 = por %p137, %p138
    %p141 = scmp.ne.s32.totalorder %s124, %s140
    %p142 = scmp.eq.s32.totalorder %s15, 0
    %p143 = por %p141, %p142
    %p144 = scmp.le.s32.totalorder 1, %s9
    %p145 = scmp.lt.s32.totalorder %s9, 3
    %p146 = pnand %p144, %p145
    %p147 = pneg %p146
    // Predicated region
    $region9: #{conv_block_forward.1} parent=5 // pred_check
      _
    $region10: #{conv_block_forward.1} parent=5 // pred_check_branch
      %149 = sbr.rel (%p146) target = $region12
    $region11: #{conv_block_forward.1} parent=5 // pred_region
      %s150 = ssub.s32 %s9, 1
      // Predicated region
      $region13: #{conv_block_forward.1} parent=11 // pred_check
        %p151 = pneg %p80
      $region14: #{conv_block_forward.1} parent=11 // pred_check_branch
        %153 = sbr.rel (%p151) target = $region16
      $region15: #{conv_block_forward.1} parent=11 // pred_region
        %p154 = scmp.lt.s32.totalorder %s20, 0
        %s155 = scalar_select %p154, %s20, 0
        %s156 = smul.addr %s155, 8
        %s157 = scalar_lea.vmem %s1, %s156
      $region16: #{conv_block_forward.1} parent=11 // pred_fallthru
        _
      // Predicated region
      $region17: #{conv_block_forward.1} parent=11 // pred_check
        %p158 = pneg %p106
      $region18: #{conv_block_forward.1} parent=11 // pred_check_branch
        %160 = sbr.rel (%p158) target = $region20
      $region19: #{conv_block_forward.1} parent=11 // pred_region
        %p161 = scmp.lt.s32.totalorder %s20, 0
        %s162 = scalar_select %p161, %s20, 0
        %s163 = scalar_lea.vmem %s2, %s162
      $region20: #{conv_block_forward.1} parent=11 // pred_fallthru
        _
    $region12: #{conv_block_forward.1} parent=5 // pred_fallthru
      _
    %p164 = scmp.lt.s32.totalorder %s9, 2
    // Predicated region
    $region21: #{conv_block_forward.1} parent=5 // pred_check
      %p165 = pneg %p164
    $region22: #{conv_block_forward.1} parent=5 // pred_check_branch
      %167 = sbr.rel (%p165) target = $region24
    $region23: #{conv_block_forward.1} parent=5 // pred_region
      // Predicated region
      $region25: #{conv_block_forward.1} parent=23 // pred_check
        %p168 = pneg %p48
      $region26: #{conv_block_forward.1} parent=23 // pred_check_branch
        %170 = sbr.rel (%p168) target = $region28
      $region27: #{conv_block_forward.1} parent=23 // pred_region
        %p171 = scmp.lt.s32.totalorder %s16, 1
        %s172 = scalar_select %p171, %s16, 1
        %s173 = smul.addr %s172, 20
        %s174 = smul.addr %s173, 8
        %s175 = scalar_lea.vmem %s0, %s174
      $region28: #{conv_block_forward.1} parent=23 // pred_fallthru
        _
    $region24: #{conv_block_forward.1} parent=5 // pred_fallthru
      _
    %p176 = scmp.le.s32.totalorder 1, %s9
    %p177 = scmp.lt.s32.totalorder %s9, 3
    %p178 = pnand %p176, %p177
    %p179 = pneg %p178
    // Predicated region
    $region29: #{conv_block_forward.1} parent=5 // pred_check
      _
    $region30: #{conv_block_forward.1} parent=5 // pred_check_branch
      %181 = sbr.rel (%p178) target = $region32
    $region31: #{conv_block_forward.1} parent=5 // pred_region
      %s182 = ssub.s32 %s9, 1
      %p183 = scmp.lt.s32.totalorder %s19, 1
      %s184 = scalar_select %p183, %s19, 1
      %s185 = smul.addr %s184, 20
      %s186 = smul.addr %s185, 8
      %s187 = scalar_lea.vmem %s0, %s186
      %p188 = pneg %p54
      %p189 = pneg %p51
      %p190 = scmp.lt.s32.totalorder %s20, 0
      %s191 = scalar_select %p190, %s20, 0
      %s192 = smul.addr %s191, 8
      %s193 = scalar_lea.vmem %s1, %s192
      %p194 = pneg %p80
      %p195 = pneg %p77
      %p196 = scmp.lt.s32.totalorder %s20, 0
      %s197 = scalar_select %p196, %s20, 0
      %s198 = scalar_lea.vmem %s2, %s197
      %p199 = pneg %p106
      %p200 = pneg %p103
      %p201 = pneg %p136
      %p202 = pneg %p133
      %s203 = smul.u32 8, %s21
      %p204 = scmp.lt.s32.totalorder %s19, 1
      %s205 = scalar_select %p204, %s19, 1
      %p206 = scmp.lt.s32.totalorder %s203, 7
      %s207 = scalar_select %p206, %s203, 7
      %p208 = scmp.lt.s32.totalorder %s20, 0
      %s209 = scalar_select %p208, %s20, 0
      %s210 = sadd.s32 %s209, %s207
      %s211 = smul.addr %s205, 8
      %s212 = sadd.s32 %s210, %s211
      %s213 = smul.addr %s212, 8
      %s214 = scalar_lea.vmem %s3, %s213
      %p215 = scmp.lt.s32.totalorder %s19, 1
      %s216 = scalar_select %p215, %s19, 1
      %s217 = smul.addr %s216, 20
      %s218 = smul.addr %s217, 8
      %s219 = scalar_lea.vmem %s0, %s218
      %p220 = scmp.lt.s32.totalorder %s20, 0
      %s221 = scalar_select %p220, %s20, 0
      %s222 = smul.addr %s221, 8
      %s223 = scalar_lea.vmem %s1, %s222
      %p224 = scmp.lt.s32.totalorder %s20, 0
      %s225 = scalar_select %p224, %s20, 0
      %s226 = scalar_lea.vmem %s2, %s225
      %s227 = smul.u32 8, %s21
      %p228 = scmp.lt.s32.totalorder %s19, 1
      %s229 = scalar_select %p228, %s19, 1
      %p230 = scmp.lt.s32.totalorder %s227, 7
      %s231 = scalar_select %p230, %s227, 7
      %p232 = scmp.lt.s32.totalorder %s20, 0
      %s233 = scalar_select %p232, %s20, 0
      %s234 = sadd.s32 %s233, %s231
      %s235 = smul.addr %s229, 8
      %s236 = sadd.s32 %s234, %s235
      %s237 = smul.addr %s236, 8
      %s238 = scalar_lea.vmem %s3, %s237
      %s239 = smul.u32 8, %s21
      %s240 = smul.u32 %s21, 8
      %s241 = smul.u32 %s240, 16
      %s242 = scalar_lea.vmem %s219, %s241
      %v243 = vld [vmem:[%s242] sm:$0xff]
      %v244 = vld [vmem:[%s242 + $0x10] sm:$0xff]
      %v245 = vld [vmem:[%s242 + $0x20] sm:$0xff]
      %v246 = vld [vmem:[%s242 + $0x30] sm:$0xff]
      %v247 = vld [vmem:[%s242 + $0x40] sm:$0xff]
      %v248 = vld [vmem:[%s242 + $0x50] sm:$0xff]
      %v249 = vld [vmem:[%s242 + $0x60] sm:$0xff]
      %v250 = vld [vmem:[%s242 + $0x70] sm:$0xff]
      %vm251 = vcmask 130048
      %252 = vst.msk [vmem:[#allocation2] sm:$0xff] %vm251, %v243
      %253 = vst.msk [vmem:[#allocation2 + $0x10] sm:$0xff] %vm251, %v244
      %254 = vst.msk [vmem:[#allocation2 + $0x20] sm:$0xff] %vm251, %v245
      %255 = vst.msk [vmem:[#allocation2 + $0x30] sm:$0xff] %vm251, %v246
      %256 = vst.msk [vmem:[#allocation2 + $0x40] sm:$0xff] %vm251, %v247
      %257 = vst.msk [vmem:[#allocation2 + $0x50] sm:$0xff] %vm251, %v248
      %258 = vst.msk [vmem:[#allocation2 + $0x60] sm:$0xff] %vm251, %v249
      %259 = vst.msk [vmem:[#allocation2 + $0x70] sm:$0xff] %vm251, %v250
      %v260 = vld [vmem:[%s242 + $0x1] sm:$0xff]
      %v261 = vld [vmem:[%s242 + $0x11] sm:$0xff]
      %v262 = vld [vmem:[%s242 + $0x21] sm:$0xff]
      %v263 = vld [vmem:[%s242 + $0x31] sm:$0xff]
      %v264 = vld [vmem:[%s242 + $0x41] sm:$0xff]
      %v265 = vld [vmem:[%s242 + $0x51] sm:$0xff]
      %v266 = vld [vmem:[%s242 + $0x61] sm:$0xff]
      %v267 = vld [vmem:[%s242 + $0x71] sm:$0xff]
      %276 = vrot.lane.b32.xlu0 %v260, 16
      %v277 = vpop.permute.xlu0 %276
      %278 = vrot.lane.b32.xlu0 %v261, 16
      %v279 = vpop.permute.xlu0 %278
      %280 = vrot.lane.b32.xlu0 %v262, 16
      %v281 = vpop.permute.xlu0 %280
      %282 = vrot.lane.b32.xlu0 %v263, 16
      %v283 = vpop.permute.xlu0 %282
      %284 = vrot.lane.b32.xlu0 %v264, 16
      %v285 = vpop.permute.xlu0 %284
      %286 = vrot.lane.b32.xlu0 %v265, 16
      %v287 = vpop.permute.xlu0 %286
      %288 = vrot.lane.b32.xlu0 %v266, 16
      %v289 = vpop.permute.xlu0 %288
      %290 = vrot.lane.b32.xlu0 %v267, 16
      %v291 = vpop.permute.xlu0 %290
      %vm300 = vcmask 261248
      %301 = vst.msk [vmem:[#allocation2] sm:$0xff] %vm300, %v277
      %302 = vst.msk [vmem:[#allocation2 + $0x10] sm:$0xff] %vm300, %v279
      %303 = vst.msk [vmem:[#allocation2 + $0x20] sm:$0xff] %vm300, %v281
      %304 = vst.msk [vmem:[#allocation2 + $0x30] sm:$0xff] %vm300, %v283
      %305 = vst.msk [vmem:[#allocation2 + $0x40] sm:$0xff] %vm300, %v285
      %306 = vst.msk [vmem:[#allocation2 + $0x50] sm:$0xff] %vm300, %v287
      %307 = vst.msk [vmem:[#allocation2 + $0x60] sm:$0xff] %vm300, %v289
      %308 = vst.msk [vmem:[#allocation2 + $0x70] sm:$0xff] %vm300, %v291
      %v309 = vld [vmem:[%s242 + $0x2] sm:$0xff]
      %v310 = vld [vmem:[%s242 + $0x12] sm:$0xff]
      %v311 = vld [vmem:[%s242 + $0x22] sm:$0xff]
      %v312 = vld [vmem:[%s242 + $0x32] sm:$0xff]
      %v313 = vld [vmem:[%s242 + $0x42] sm:$0xff]
      %v314 = vld [vmem:[%s242 + $0x52] sm:$0xff]
      %v315 = vld [vmem:[%s242 + $0x62] sm:$0xff]
      %v316 = vld [vmem:[%s242 + $0x72] sm:$0xff]
      %325 = vrot.lane.b32.xlu0 %v309, 32
      %v326 = vpop.permute.xlu0 %325
      %327 = vrot.lane.b32.xlu0 %v310, 32
      %v328 = vpop.permute.xlu0 %327
      %329 = vrot.lane.b32.xlu0 %v311, 32
      %v330 = vpop.permute.xlu0 %329
      %331 = vrot.lane.b32.xlu0 %v312, 32
      %v332 = vpop.permute.xlu0 %331
      %333 = vrot.lane.b32.xlu0 %v313, 32
      %v334 = vpop.permute.xlu0 %333
      %335 = vrot.lane.b32.xlu0 %v314, 32
      %v336 = vpop.permute.xlu0 %335
      %337 = vrot.lane.b32.xlu0 %v315, 32
      %v338 = vpop.permute.xlu0 %337
      %339 = vrot.lane.b32.xlu0 %v316, 32
      %v340 = vpop.permute.xlu0 %339
      %vm349 = vcmask 392448
      %350 = vst.msk [vmem:[#allocation2] sm:$0xff] %vm349, %v326
      %351 = vst.msk [vmem:[#allocation2 + $0x10] sm:$0xff] %vm349, %v328
      %352 = vst.msk [vmem:[#allocation2 + $0x20] sm:$0xff] %vm349, %v330
      %353 = vst.msk [vmem:[#allocation2 + $0x30] sm:$0xff] %vm349, %v332
      %354 = vst.msk [vmem:[#allocation2 + $0x40] sm:$0xff] %vm349, %v334
      %355 = vst.msk [vmem:[#allocation2 + $0x50] sm:$0xff] %vm349, %v336
      %356 = vst.msk [vmem:[#allocation2 + $0x60] sm:$0xff] %vm349, %v338
      %357 = vst.msk [vmem:[#allocation2 + $0x70] sm:$0xff] %vm349, %v340
      %s358 = sadd.s32 %s240, 1
      %s359 = smul.u32 %s358, 16
      %s360 = scalar_lea.vmem %s219, %s359
      %v361 = vld [vmem:[%s360] sm:$0xff]
      %v362 = vld [vmem:[%s360 + $0x10] sm:$0xff]
      %v363 = vld [vmem:[%s360 + $0x20] sm:$0xff]
      %v364 = vld [vmem:[%s360 + $0x30] sm:$0xff]
      %v365 = vld [vmem:[%s360 + $0x40] sm:$0xff]
      %v366 = vld [vmem:[%s360 + $0x50] sm:$0xff]
      %v367 = vld [vmem:[%s360 + $0x60] sm:$0xff]
      %v368 = vld [vmem:[%s360 + $0x70] sm:$0xff]
      %377 = vrot.lane.b32.xlu0 %v361, 48
      %v378 = vpop.permute.xlu0 %377
      %379 = vrot.lane.b32.xlu0 %v362, 48
      %v380 = vpop.permute.xlu0 %379
      %381 = vrot.lane.b32.xlu0 %v363, 48
      %v382 = vpop.permute.xlu0 %381
      %383 = vrot.lane.b32.xlu0 %v364, 48
      %v384 = vpop.permute.xlu0 %383
      %385 = vrot.lane.b32.xlu0 %v365, 48
      %v386 = vpop.permute.xlu0 %385
      %387 = vrot.lane.b32.xlu0 %v366, 48
      %v388 = vpop.permute.xlu0 %387
      %389 = vrot.lane.b32.xlu0 %v367, 48
      %v390 = vpop.permute.xlu0 %389
      %391 = vrot.lane.b32.xlu0 %v368, 48
      %v392 = vpop.permute.xlu0 %391
      %vm401 = vcmask 523648
      %402 = vst.msk [vmem:[#allocation2] sm:$0xff] %vm401, %v378
      %403 = vst.msk [vmem:[#allocation2 + $0x10] sm:$0xff] %vm401, %v380
      %404 = vst.msk [vmem:[#allocation2 + $0x20] sm:$0xff] %vm401, %v382
      %405 = vst.msk [vmem:[#allocation2 + $0x30] sm:$0xff] %vm401, %v384
      %406 = vst.msk [vmem:[#allocation2 + $0x40] sm:$0xff] %vm401, %v386
      %407 = vst.msk [vmem:[#allocation2 + $0x50] sm:$0xff] %vm401, %v388
      %408 = vst.msk [vmem:[#allocation2 + $0x60] sm:$0xff] %vm401, %v390
      %409 = vst.msk [vmem:[#allocation2 + $0x70] sm:$0xff] %vm401, %v392
      %v410 = vld [vmem:[%s360 + $0x1] sm:$0xff]
      %v411 = vld [vmem:[%s360 + $0x11] sm:$0xff]
      %v412 = vld [vmem:[%s360 + $0x21] sm:$0xff]
      %v413 = vld [vmem:[%s360 + $0x31] sm:$0xff]
      %v414 = vld [vmem:[%s360 + $0x41] sm:$0xff]
      %v415 = vld [vmem:[%s360 + $0x51] sm:$0xff]
      %v416 = vld [vmem:[%s360 + $0x61] sm:$0xff]
      %v417 = vld [vmem:[%s360 + $0x71] sm:$0xff]
      %426 = vrot.lane.b32.xlu0 %v410, 64
      %v427 = vpop.permute.xlu0 %426
      %428 = vrot.lane.b32.xlu0 %v411, 64
      %v429 = vpop.permute.xlu0 %428
      %430 = vrot.lane.b32.xlu0 %v412, 64
      %v431 = vpop.permute.xlu0 %430
      %432 = vrot.lane.b32.xlu0 %v413, 64
      %v433 = vpop.permute.xlu0 %432
      %434 = vrot.lane.b32.xlu0 %v414, 64
      %v435 = vpop.permute.xlu0 %434
      %436 = vrot.lane.b32.xlu0 %v415, 64
      %v437 = vpop.permute.xlu0 %436
      %438 = vrot.lane.b32.xlu0 %v416, 64
      %v439 = vpop.permute.xlu0 %438
      %440 = vrot.lane.b32.xlu0 %v417, 64
      %v441 = vpop.permute.xlu0 %440
      %vm450 = vcmask 654848
      %451 = vst.msk [vmem:[#allocation2] sm:$0xff] %vm450, %v427
      %452 = vst.msk [vmem:[#allocation2 + $0x10] sm:$0xff] %vm450, %v429
      %453 = vst.msk [vmem:[#allocation2 + $0x20] sm:$0xff] %vm450, %v431
      %454 = vst.msk [vmem:[#allocation2 + $0x30] sm:$0xff] %vm450, %v433
      %455 = vst.msk [vmem:[#allocation2 + $0x40] sm:$0xff] %vm450, %v435
      %456 = vst.msk [vmem:[#allocation2 + $0x50] sm:$0xff] %vm450, %v437
      %457 = vst.msk [vmem:[#allocation2 + $0x60] sm:$0xff] %vm450, %v439
      %458 = vst.msk [vmem:[#allocation2 + $0x70] sm:$0xff] %vm450, %v441
      %v459 = vld [vmem:[%s360 + $0x2] sm:$0xff]
      %v460 = vld [vmem:[%s360 + $0x12] sm:$0xff]
      %v461 = vld [vmem:[%s360 + $0x22] sm:$0xff]
      %v462 = vld [vmem:[%s360 + $0x32] sm:$0xff]
      %v463 = vld [vmem:[%s360 + $0x42] sm:$0xff]
      %v464 = vld [vmem:[%s360 + $0x52] sm:$0xff]
      %v465 = vld [vmem:[%s360 + $0x62] sm:$0xff]
      %v466 = vld [vmem:[%s360 + $0x72] sm:$0xff]
      %475 = vrot.lane.b32.xlu0 %v459, 80
      %v476 = vpop.permute.xlu0 %475
      %477 = vrot.lane.b32.xlu0 %v460, 80
      %v478 = vpop.permute.xlu0 %477
      %479 = vrot.lane.b32.xlu0 %v461, 80
      %v480 = vpop.permute.xlu0 %479
      %481 = vrot.lane.b32.xlu0 %v462, 80
      %v482 = vpop.permute.xlu0 %481
      %483 = vrot.lane.b32.xlu0 %v463, 80
      %v484 = vpop.permute.xlu0 %483
      %485 = vrot.lane.b32.xlu0 %v464, 80
      %v486 = vpop.permute.xlu0 %485
      %487 = vrot.lane.b32.xlu0 %v465, 80
      %v488 = vpop.permute.xlu0 %487
      %489 = vrot.lane.b32.xlu0 %v466, 80
      %v490 = vpop.permute.xlu0 %489
      %vm499 = vcmask 786048
      %500 = vst.msk [vmem:[#allocation2] sm:$0xff] %vm499, %v476
      %501 = vst.msk [vmem:[#allocation2 + $0x10] sm:$0xff] %vm499, %v478
      %502 = vst.msk [vmem:[#allocation2 + $0x20] sm:$0xff] %vm499, %v480
      %503 = vst.msk [vmem:[#allocation2 + $0x30] sm:$0xff] %vm499, %v482
      %504 = vst.msk [vmem:[#allocation2 + $0x40] sm:$0xff] %vm499, %v484
      %505 = vst.msk [vmem:[#allocation2 + $0x50] sm:$0xff] %vm499, %v486
      %506 = vst.msk [vmem:[#allocation2 + $0x60] sm:$0xff] %vm499, %v488
      %507 = vst.msk [vmem:[#allocation2 + $0x70] sm:$0xff] %vm499, %v490
      %s508 = sadd.s32 %s240, 2
      %s509 = smul.u32 %s508, 16
      %s510 = scalar_lea.vmem %s219, %s509
      %v511 = vld [vmem:[%s510] sm:$0xff]
      %v512 = vld [vmem:[%s510 + $0x10] sm:$0xff]
      %v513 = vld [vmem:[%s510 + $0x20] sm:$0xff]
      %v514 = vld [vmem:[%s510 + $0x30] sm:$0xff]
      %v515 = vld [vmem:[%s510 + $0x40] sm:$0xff]
      %v516 = vld [vmem:[%s510 + $0x50] sm:$0xff]
      %v517 = vld [vmem:[%s510 + $0x60] sm:$0xff]
      %v518 = vld [vmem:[%s510 + $0x70] sm:$0xff]
      %527 = vrot.lane.b32.xlu0 %v511, 96
      %v528 = vpop.permute.xlu0 %527
      %529 = vrot.lane.b32.xlu0 %v512, 96
      %v530 = vpop.permute.xlu0 %529
      %531 = vrot.lane.b32.xlu0 %v513, 96
      %v532 = vpop.permute.xlu0 %531
      %533 = vrot.lane.b32.xlu0 %v514, 96
      %v534 = vpop.permute.xlu0 %533
      %535 = vrot.lane.b32.xlu0 %v515, 96
      %v536 = vpop.permute.xlu0 %535
      %537 = vrot.lane.b32.xlu0 %v516, 96
      %v538 = vpop.permute.xlu0 %537
      %539 = vrot.lane.b32.xlu0 %v517, 96
      %v540 = vpop.permute.xlu0 %539
      %541 = vrot.lane.b32.xlu0 %v518, 96
      %v542 = vpop.permute.xlu0 %541
      %vm551 = vcmask 917248
      %552 = vst.msk [vmem:[#allocation2] sm:$0xff] %vm551, %v528
      %553 = vst.msk [vmem:[#allocation2 + $0x10] sm:$0xff] %vm551, %v530
      %554 = vst.msk [vmem:[#allocation2 + $0x20] sm:$0xff] %vm551, %v532
      %555 = vst.msk [vmem:[#allocation2 + $0x30] sm:$0xff] %vm551, %v534
      %556 = vst.msk [vmem:[#allocation2 + $0x40] sm:$0xff] %vm551, %v536
      %557 = vst.msk [vmem:[#allocation2 + $0x50] sm:$0xff] %vm551, %v538
      %558 = vst.msk [vmem:[#allocation2 + $0x60] sm:$0xff] %vm551, %v540
      %559 = vst.msk [vmem:[#allocation2 + $0x70] sm:$0xff] %vm551, %v542
      %v560 = vld [vmem:[%s510 + $0x1] sm:$0xff]
      %v561 = vld [vmem:[%s510 + $0x11] sm:$0xff]
      %v562 = vld [vmem:[%s510 + $0x21] sm:$0xff]
      %v563 = vld [vmem:[%s510 + $0x31] sm:$0xff]
      %v564 = vld [vmem:[%s510 + $0x41] sm:$0xff]
      %v565 = vld [vmem:[%s510 + $0x51] sm:$0xff]
      %v566 = vld [vmem:[%s510 + $0x61] sm:$0xff]
      %v567 = vld [vmem:[%s510 + $0x71] sm:$0xff]
      %576 = vrot.lane.b32.xlu0 %v560, 112
      %v577 = vpop.permute.xlu0 %576
      %578 = vrot.lane.b32.xlu0 %v561, 112
      %v579 = vpop.permute.xlu0 %578
      %580 = vrot.lane.b32.xlu0 %v562, 112
      %v581 = vpop.permute.xlu0 %580
      %582 = vrot.lane.b32.xlu0 %v563, 112
      %v583 = vpop.permute.xlu0 %582
      %584 = vrot.lane.b32.xlu0 %v564, 112
      %v585 = vpop.permute.xlu0 %584
      %586 = vrot.lane.b32.xlu0 %v565, 112
      %v587 = vpop.permute.xlu0 %586
      %588 = vrot.lane.b32.xlu0 %v566, 112
      %v589 = vpop.permute.xlu0 %588
      %590 = vrot.lane.b32.xlu0 %v567, 112
      %v591 = vpop.permute.xlu0 %590
      %vm600 = vcmask 1048448
      %601 = vst.msk [vmem:[#allocation2] sm:$0xff] %vm600, %v577
      %602 = vst.msk [vmem:[#allocation2 + $0x10] sm:$0xff] %vm600, %v579
      %603 = vst.msk [vmem:[#allocation2 + $0x20] sm:$0xff] %vm600, %v581
      %604 = vst.msk [vmem:[#allocation2 + $0x30] sm:$0xff] %vm600, %v583
      %605 = vst.msk [vmem:[#allocation2 + $0x40] sm:$0xff] %vm600, %v585
      %606 = vst.msk [vmem:[#allocation2 + $0x50] sm:$0xff] %vm600, %v587
      %607 = vst.msk [vmem:[#allocation2 + $0x60] sm:$0xff] %vm600, %v589
      %608 = vst.msk [vmem:[#allocation2 + $0x70] sm:$0xff] %vm600, %v591
      %v609 = vld [vmem:[%s510 + $0x2] sm:$0xff]
      %v610 = vld [vmem:[%s510 + $0x12] sm:$0xff]
      %v611 = vld [vmem:[%s510 + $0x22] sm:$0xff]
      %v612 = vld [vmem:[%s510 + $0x32] sm:$0xff]
      %v613 = vld [vmem:[%s510 + $0x42] sm:$0xff]
      %v614 = vld [vmem:[%s510 + $0x52] sm:$0xff]
      %v615 = vld [vmem:[%s510 + $0x62] sm:$0xff]
      %v616 = vld [vmem:[%s510 + $0x72] sm:$0xff]
      %617 = vst.msk [vmem:[#allocation2 + $0x8] sm:$0xff] %vm251, %v609
      %618 = vst.msk [vmem:[#allocation2 + $0x18] sm:$0xff] %vm251, %v610
      %619 = vst.msk [vmem:[#allocation2 + $0x28] sm:$0xff] %vm251, %v611
      %620 = vst.msk [vmem:[#allocation2 + $0x38] sm:$0xff] %vm251, %v612
      %621 = vst.msk [vmem:[#allocation2 + $0x48] sm:$0xff] %vm251, %v613
      %622 = vst.msk [vmem:[#allocation2 + $0x58] sm:$0xff] %vm251, %v614
      %623 = vst.msk [vmem:[#allocation2 + $0x68] sm:$0xff] %vm251, %v615
      %624 = vst.msk [vmem:[#allocation2 + $0x78] sm:$0xff] %vm251, %v616
      %v625 = vld [vmem:[#allocation2] sm:$0xff]
      %v626 = vld [vmem:[#allocation2 + $0x8] sm:$0xff]
      %v627 = vld [vmem:[#allocation2 + $0x10] sm:$0xff]
      %v628 = vld [vmem:[#allocation2 + $0x18] sm:$0xff]
      %v629 = vld [vmem:[#allocation2 + $0x20] sm:$0xff]
      %v630 = vld [vmem:[#allocation2 + $0x28] sm:$0xff]
      %v631 = vld [vmem:[#allocation2 + $0x30] sm:$0xff]
      %v632 = vld [vmem:[#allocation2 + $0x38] sm:$0xff]
      %v633 = vld [vmem:[#allocation2 + $0x40] sm:$0xff]
      %v634 = vld [vmem:[#allocation2 + $0x48] sm:$0xff]
      %v635 = vld [vmem:[#allocation2 + $0x50] sm:$0xff]
      %v636 = vld [vmem:[#allocation2 + $0x58] sm:$0xff]
      %v637 = vld [vmem:[#allocation2 + $0x60] sm:$0xff]
      %v638 = vld [vmem:[#allocation2 + $0x68] sm:$0xff]
      %v639 = vld [vmem:[#allocation2 + $0x70] sm:$0xff]
      %v640 = vld [vmem:[#allocation2 + $0x78] sm:$0xff]
      %v641 = vld [vmem:[%s223] sm:$0xff]
      %v642 = vld [vmem:[%s223 + $0x8] sm:$0xff]
      %v643 = vld [vmem:[%s223 + $0x10] sm:$0xff]
      %v644 = vld [vmem:[%s223 + $0x18] sm:$0xff]
      %v645 = vld [vmem:[%s223 + $0x20] sm:$0xff]
      %v646 = vld [vmem:[%s223 + $0x28] sm:$0xff]
      %v647 = vld [vmem:[%s223 + $0x30] sm:$0xff]
      %v648 = vld [vmem:[%s223 + $0x38] sm:$0xff]
      %v649 = vld [vmem:[%s223 + $0x40] sm:$0xff]
      %v650 = vld [vmem:[%s223 + $0x48] sm:$0xff]
      %v651 = vld [vmem:[%s223 + $0x50] sm:$0xff]
      %v652 = vld [vmem:[%s223 + $0x58] sm:$0xff]
      %v653 = vld [vmem:[%s223 + $0x60] sm:$0xff]
      %v654 = vld [vmem:[%s223 + $0x68] sm:$0xff]
      %v655 = vld [vmem:[%s223 + $0x70] sm:$0xff]
      %v656 = vld [vmem:[%s223 + $0x78] sm:$0xff]
      %v657 = vld [vmem:[%s223 + $0x80] sm:$0xff]
      %v658 = vld [vmem:[%s223 + $0x88] sm:$0xff]
      %v659 = vld [vmem:[%s226] sm:$0x1]
      %v661 = vperm.slane %v659, 0
      %v664 = vsel %vm251, %v626, 0
      %v667 = vsel %vm251, %v628, 0
      %v670 = vsel %vm251, %v630, 0
      %v673 = vsel %vm251, %v632, 0
      %v676 = vsel %vm251, %v634, 0
      %v679 = vsel %vm251, %v636, 0
      %v682 = vsel %vm251, %v638, 0
      %v685 = vsel %vm251, %v640, 0
      %687 = vmatpush.msra.mxu0 %v656
      %688 = vmatpush.msra.mxu0 %v655
      %689 = vmatpush.msra.mxu0 %v654
      %690 = vmatpush.msra.mxu0 %v653
      %691 = vmatpush.msra.mxu0 %v652
      %692 = vmatpush.msra.mxu0 %v651
      %693 = vmatpush.msra.mxu0 %v650
      %694 = vmatpush.msra.mxu0 %v649
      %695 = vmatpush.msra.mxu0 %v648
      %696 = vmatpush.msra.mxu0 %v647
      %697 = vmatpush.msra.mxu0 %v646
      %698 = vmatpush.msra.mxu0 %v645
      %699 = vmatpush.msra.mxu0 %v644
      %700 = vmatpush.msra.mxu0 %v643
      %701 = vmatpush.msra.mxu0 %v642
      %702 = vmatpush.msra.mxu0 %v641
      %703 = vmatmul.f32.gmra.mxu0 %v625
      %v704 = vpop.f32.mrf.mxu0
      %v705 = vadd.f32 %v661, %v704
      %706 = vmatmul.f32.gmra.mxu0 %v627
      %v707 = vpop.f32.mrf.mxu0
      %v708 = vadd.f32 %v661, %v707
      %709 = vmatmul.f32.gmra.mxu0 %v629
      %v710 = vpop.f32.mrf.mxu0
      %v711 = vadd.f32 %v661, %v710
      %712 = vmatmul.f32.gmra.mxu0 %v631
      %v713 = vpop.f32.mrf.mxu0
      %v714 = vadd.f32 %v661, %v713
      %715 = vmatmul.f32.gmra.mxu0 %v633
      %v716 = vpop.f32.mrf.mxu0
      %v717 = vadd.f32 %v661, %v716
      %718 = vmatmul.f32.gmra.mxu0 %v635
      %v719 = vpop.f32.mrf.mxu0
      %v720 = vadd.f32 %v661, %v719
      %721 = vmatmul.f32.gmra.mxu0 %v637
      %v722 = vpop.f32.mrf.mxu0
      %v723 = vadd.f32 %v661, %v722
      %724 = vmatmul.f32.gmra.mxu0 %v639
      %v725 = vpop.f32.mrf.mxu0
      %v726 = vadd.f32 %v661, %v725
      %727 = vdwg.mxu0
      %728 = vmatpush.msra.mxu0 0.0
      %729 = vmatpush.msra.mxu0 0.0
      %730 = vmatpush.msra.mxu0 0.0
      %731 = vmatpush.msra.mxu0 0.0
      %732 = vmatpush.msra.mxu0 0.0
      %733 = vmatpush.msra.mxu0 0.0
      %734 = vmatpush.msra.mxu0 0.0
      %735 = vmatpush.msra.mxu0 0.0
      %736 = vmatpush.msra.mxu0 0.0
      %737 = vmatpush.msra.mxu0 0.0
      %738 = vmatpush.msra.mxu0 0.0
      %739 = vmatpush.msra.mxu0 0.0
      %740 = vmatpush.msra.mxu0 0.0
      %741 = vmatpush.msra.mxu0 0.0
      %742 = vmatpush.msra.mxu0 %v658
      %743 = vmatpush.msra.mxu0 %v657
      %744 = vmatmul.f32.gmra.mxu0 %v664
      %v745 = vpop.f32.mrf.mxu0
      %v746 = vadd.f32 %v705, %v745
      %747 = vmatmul.f32.gmra.mxu0 %v667
      %v748 = vpop.f32.mrf.mxu0
      %v749 = vadd.f32 %v708, %v748
      %750 = vmatmul.f32.gmra.mxu0 %v670
      %v751 = vpop.f32.mrf.mxu0
      %v752 = vadd.f32 %v711, %v751
      %753 = vmatmul.f32.gmra.mxu0 %v673
      %v754 = vpop.f32.mrf.mxu0
      %v755 = vadd.f32 %v714, %v754
      %756 = vmatmul.f32.gmra.mxu0 %v676
      %v757 = vpop.f32.mrf.mxu0
      %v758 = vadd.f32 %v717, %v757
      %759 = vmatmul.f32.gmra.mxu0 %v679
      %v760 = vpop.f32.mrf.mxu0
      %v761 = vadd.f32 %v720, %v760
      %762 = vmatmul.f32.gmra.mxu0 %v682
      %v763 = vpop.f32.mrf.mxu0
      %v764 = vadd.f32 %v723, %v763
      %765 = vmatmul.f32.gmra.mxu0 %v685
      %v766 = vpop.f32.mrf.mxu0
      %v767 = vadd.f32 %v726, %v766
      %768 = vdwg.mxu0
      %v769 = vmul.f32 %v746, 0.2
      %v770 = vmul.f32 %v749, 0.2
      %v771 = vmul.f32 %v752, 0.2
      %v772 = vmul.f32 %v755, 0.2
      %v773 = vmul.f32 %v758, 0.2
      %v774 = vmul.f32 %v761, 0.2
      %v775 = vmul.f32 %v764, 0.2
      %v776 = vmul.f32 %v767, 0.2
      %v777 = vmax.f32 %v746, %v769
      %v778 = vmax.f32 %v749, %v770
      %v779 = vmax.f32 %v752, %v771
      %v780 = vmax.f32 %v755, %v772
      %v781 = vmax.f32 %v758, %v773
      %v782 = vmax.f32 %v761, %v774
      %v783 = vmax.f32 %v764, %v775
      %v784 = vmax.f32 %v767, %v776
      %785 = vst [vmem:[%s238] sm:$0xff] %v777
      %786 = vst [vmem:[%s238 + $0x8] sm:$0xff] %v778
      %787 = vst [vmem:[%s238 + $0x10] sm:$0xff] %v779
      %788 = vst [vmem:[%s238 + $0x18] sm:$0xff] %v780
      %789 = vst [vmem:[%s238 + $0x20] sm:$0xff] %v781
      %790 = vst [vmem:[%s238 + $0x28] sm:$0xff] %v782
      %791 = vst [vmem:[%s238 + $0x30] sm:$0xff] %v783
      %792 = vst [vmem:[%s238 + $0x38] sm:$0xff] %v784
      %s793 = smul.u32 8, %s21
      %p794 = scmp.lt.s32.totalorder %s19, 1
      %s795 = scalar_select %p794, %s19, 1
      %p796 = scmp.lt.s32.totalorder %s793, 7
      %s797 = scalar_select %p796, %s793, 7
      %p798 = scmp.lt.s32.totalorder %s20, 0
      %s799 = scalar_select %p798, %s20, 0
      %s800 = sadd.s32 %s799, %s797
      %s801 = smul.addr %s795, 8
      %s802 = sadd.s32 %s800, %s801
      %s803 = smul.addr %s802, 8
      %s804 = scalar_lea.vmem %s3, %s803
      // Predicated region
      $region33: #{conv_block_forward.1} parent=31 // pred_check
        %p805 = pneg %p133
      $region34: #{conv_block_forward.1} parent=31 // pred_check_branch
        %807 = sbr.rel (%p805) target = $region36
      $region35: #{conv_block_forward.1} parent=31 // pred_region
        %s808 = smul.u32 8, %s21
      $region36: #{conv_block_forward.1} parent=31 // pred_fallthru
        _
    $region32: #{conv_block_forward.1} parent=5 // pred_fallthru
      _
    %p809 = scmp.le.s32.totalorder 2, %s9
    // Predicated region
    $region37: #{conv_block_forward.1} parent=5 // pred_check
      %p810 = pneg %p809
    $region38: #{conv_block_forward.1} parent=5 // pred_check_branch
      %812 = sbr.rel (%p810) target = $region40
    $region39: #{conv_block_forward.1} parent=5 // pred_region
      %s813 = ssub.s32 %s9, 2
      // Predicated region
      $region41: #{conv_block_forward.1} parent=39 // pred_check
        %p814 = pneg %p139
      $region42: #{conv_block_forward.1} parent=39 // pred_check_branch
        %816 = sbr.rel (%p814) target = $region44
      $region43: #{conv_block_forward.1} parent=39 // pred_region
        %s817 = smul.u32 8, %s24
        %p818 = scmp.lt.s32.totalorder %s22, 1
        %s819 = scalar_select %p818, %s22, 1
        %p820 = scmp.lt.s32.totalorder %s817, 7
        %s821 = scalar_select %p820, %s817, 7
        %p822 = scmp.lt.s32.totalorder %s23, 0
        %s823 = scalar_select %p822, %s23, 0
        %s824 = sadd.s32 %s823, %s821
        %s825 = smul.addr %s819, 8
        %s826 = sadd.s32 %s824, %s825
        %s827 = smul.addr %s826, 8
        %s828 = scalar_lea.vmem %s3, %s827
      $region44: #{conv_block_forward.1} parent=39 // pred_fallthru
        _
    $region40: #{conv_block_forward.1} parent=5 // pred_fallthru
      _
  $region6: #{conv_block_forward.1} parent=0 // loop_footer
    %s13 = sadd.s32 1, %s9
  $region7: #{conv_block_forward.1} parent=0 // loop_footer_branch
    %8 = sbr.rel target = $region3
  $region8: #{conv_block_forward.1} parent=0 // loop_exit
    _

</llo_original>
